<compile_context>
chip_gen: v5e
topology: v5e:2x2
jax: 0.10.0
libtpu: 0.0.40
codegen_flags: <defaults>
</compile_context>

<pallas_src>
import jax
import jax.numpy as jnp
import numpy as np
from jax.experimental import pallas as pl
from jax.experimental.pallas import tpu as pltpu


def _round_up(x, m):
    return ((x + m - 1) // m) * m


def _dft_cos_sin(n, n_pad, dtype=np.float32):
    """(n_pad, n_pad) cosine / sine DFT matrices of order n, zero-padded."""
    idx = np.arange(n)
    theta = 2.0 * np.pi * np.outer(idx, idx) / n
    c = np.zeros((n_pad, n_pad), dtype)
    s = np.zeros((n_pad, n_pad), dtype)
    c[:n, :n] = np.cos(theta)
    s[:n, :n] = np.sin(theta)
    return c, s


def _hidden_dft_interleaved(d, d_pad, tn):
    """(Dp, 2*Dp) matrix whose (Dp, 2*tn) column-block j is [C_D tile j | S_D tile j]."""
    c, s = _dft_cos_sin(d, d_pad)
    nt = d_pad // tn
    inter = np.concatenate(
        [c.reshape(d_pad, nt, tn), s.reshape(d_pad, nt, tn)], axis=2)
    return jnp.asarray(inter.reshape(d_pad, 2 * d_pad))


def _fnet_kernel(x_ref, cdsd_ref, cn_ref, sn_ref, out_ref):
    # x_ref:    (bb, Np, Dp)   block of bb batch elements (original dtype)
    # cdsd_ref: (Dp, 2*tn)     interleaved [C_D tile j | S_D tile j]  (f32)
    # cn_ref:   (Np, Np)       cosine DFT matrix (sequence axis), grid-invariant
    # sn_ref:   (Np, Np)       sine   DFT matrix (sequence axis), grid-invariant
    # out_ref:  (bb, Np, tn)   output block (original dtype)
    bb, n, dp = x_ref.shape
    tn = out_ref.shape[-1]

    # Fold batch into the matmul M dimension (free re-view: n % 8 == 0) and do
    # the hidden-axis cosine+sine DFT as ONE MXU matmul of output width 2*tn.
    x2 = x_ref[...].astype(jnp.float32).reshape(bb * n, dp)
    ab = jnp.dot(x2, cdsd_ref[...], preferred_element_type=jnp.float32)
    ab = ab.reshape(bb, n, 2 * tn)

    # Sequence-axis mixing: per-batch 2-D dots reusing the single resident
    # (Np, Np) DFT matrices — no (bb, Np, Np) broadcast materialization.
    cn = cn_ref[...]
    sn = sn_ref[...]
    for b in range(bb):                       # bb is a compile-time constant
        a_b = ab[b, :, :tn]                   # lane-aligned (free) slices
        b_b = ab[b, :, tn:]
        re = jnp.dot(cn, a_b, preferred_element_type=jnp.float32)
        re = re - jnp.dot(sn, b_b, preferred_element_type=jnp.float32)
        out_ref[b] = re.astype(out_ref.dtype)


def _vmem_limit_bytes():
    """Scoped-VMEM request: physical capacity minus ~25% compiler headroom."""
    try:
        cap = int(pltpu.get_tpu_info().vmem_capacity_bytes)
    except Exception:
        cap = 64 << 20   # conservative fallback (v7x per-TC size)
    return int(max(min(cap - cap // 4, 112 << 20), 16 << 20))


def _pick_batch_block(batch, n_pad, d_pad, tn, itemsize, budget_bytes):
    """Largest divisor of `batch` whose per-step footprint fits the budget."""
    for cand in range(batch, 0, -1):
        if batch % cand:
            continue
        x_blk = 2 * cand * n_pad * d_pad * itemsize       # double-buffered input
        out_blk = 2 * cand * n_pad * tn * itemsize        # double-buffered output
        interm = 4 * (cand * n_pad * d_pad                # x2 f32 upcast
                      + 2 * cand * n_pad * tn             # ab
                      + n_pad * tn)                       # re (one live at a time)
        if x_blk + out_blk + interm <= budget_bytes:
            return cand
    return 1


def fnet_block(x, *, d_tile=512, interpret=False):
    """Pallas FNetBlock.forward: real(fft(fft(x, dim=-1), dim=-2)), x: (B, N, D)."""
    B, N, D = x.shape
    orig_dtype = x.dtype
    itemsize = jnp.dtype(orig_dtype).itemsize

    # Pad N to sublane (8) and D to lane (128) multiples. Widen the D padding to
    # a multiple of 256 when the extra FLOPs cost less than a half-wide MXU.
    Np = _round_up(N, 8)
    Dp = _round_up(D, 128)
    if Dp % 256 != 0:
        Dp256 = _round_up(D, 256)
        if Dp256 * Dp256 < 2 * Dp * Dp:
            Dp = Dp256
    d_tile = max(128, (d_tile // 128) * 128)
    tn = next(t for t in (min(d_tile, 512), 512, 256, 128) if Dp % t == 0)

    vmem_limit = _vmem_limit_bytes()
    # Weight footprint resident per step (double-buffered by the pipeliner).
    fixed_bytes = 2 * Dp * (2 * tn) * 4 + 2 * 2 * Np * Np * 4
    budget = max((vmem_limit - fixed_bytes) * 2 // 3, 1 << 20)
    bb = _pick_batch_block(B, Np, Dp, tn, itemsize, budget)

    # Zero-pad the input in its ORIGINAL dtype (padding is exact: padded
    # rows/cols only ever multiply zeros); skip the copy when already aligned.
    if (Np, Dp) == (N, D):
        xp = x
    else:
        xp = jnp.zeros((B, Np, Dp), orig_dtype).at[:, :N, :D].set(x)

    cdsd = _hidden_dft_interleaved(D, Dp, tn)      # (Dp, 2*Dp) f32
    cn_np, sn_np = _dft_cos_sin(N, Np)
    cn = jnp.asarray(cn_np)
    sn = jnp.asarray(sn_np)

    grid = (B // bb, Dp // tn)

    # Ensure the scoped-VMEM request covers the chosen block footprint.
    need = (2 * bb * Np * Dp * itemsize + 2 * bb * Np * tn * itemsize
            + 4 * (bb * Np * Dp + 2 * bb * Np * tn + Np * tn) + fixed_bytes)
    vmem_limit = int(min(max(vmem_limit, need * 3 // 2), 128 << 20))

    flops = 4 * B * Np * Dp * (Dp + Np)
    bytes_accessed = itemsize * 2 * B * Np * Dp + 4 * (2 * Dp * Dp + 2 * Np * Np)

    # Shard the batch axis across TensorCores (v7x) so each TC DMAs disjoint x;
    # the d-tile axis would otherwise duplicate the same x block on both cores.
    dims = ("parallel", "arbitrary") if B // bb >= 2 else ("arbitrary", "parallel")

    out = pl.pallas_call(
        _fnet_kernel,
        out_shape=jax.ShapeDtypeStruct((B, Np, Dp), orig_dtype),
        grid_spec=pltpu.PrefetchScalarGridSpec(
            num_scalar_prefetch=0,
            grid=grid,
            in_specs=[
                pl.BlockSpec((bb, Np, Dp), lambda i, j: (i, 0, 0)),   # x batch block
                pl.BlockSpec((Dp, 2 * tn), lambda i, j: (0, j)),      # [C_D|S_D] tile
                pl.BlockSpec((Np, Np), lambda i, j: (0, 0)),          # C_N (invariant)
                pl.BlockSpec((Np, Np), lambda i, j: (0, 0)),          # S_N (invariant)
            ],
            out_specs=pl.BlockSpec((bb, Np, tn), lambda i, j: (i, 0, j)),
        ),
        compiler_params=pltpu.CompilerParams(
            dimension_semantics=dims,
            vmem_limit_bytes=vmem_limit,
        ),
        cost_estimate=pl.CostEstimate(
            flops=flops, transcendentals=0, bytes_accessed=bytes_accessed),
        interpret=interpret,
    )(xp, cdsd, cn, sn)

    if (Np, Dp) != (N, D):
        out = out[:, :N, :D]
    return out


if __name__ == "__main__":
    key = jax.random.PRNGKey(0)
    B, N, D = 2, 8, 32  # batch, sequence length, hidden dim
    x = jax.random.normal(key, (B, N, D), dtype=jnp.float32)

    out = fnet_block(x)
    out = jax.block_until_ready(out)

    # Reference: real part of 2-D FFT over the last two axes (same as the module).
    ref = jnp.real(jnp.fft.fft(jnp.fft.fft(x, axis=-1), axis=-2))
    np.testing.assert_allclose(np.asarray(out), np.asarray(ref),
                               rtol=1e-4, atol=1e-3)

    print("KERNEL_OK")
</pallas_src>

<mosaic_0001>
module attributes {stable_mosaic.version = 11 : i64} {
  func.func @_fnet_kernel(%arg0: i32, %arg1: i32, %arg2: memref<2x8x128xf32, #tpu.memory_space<vmem>>, %arg3: memref<128x256xf32, #tpu.memory_space<vmem>>, %arg4: memref<8x8xf32, #tpu.memory_space<vmem>>, %arg5: memref<8x8xf32, #tpu.memory_space<vmem>>, %arg6: memref<2x8x128xf32, #tpu.memory_space<vmem>>) attributes {dimension_semantics = [#tpu.dimension_semantics<arbitrary>, #tpu.dimension_semantics<parallel>], iteration_bounds = array<i64: 1, 1>, scalar_prefetch = 0 : i64, scratch_operands = 0 : i64, tpu.core_type = #tpu.core_type<tc>, window_params = [{transform_indices = @transform_0, window_bounds = array<i64: 2, 8, 128>}, {transform_indices = @transform_1, window_bounds = array<i64: 128, 256>}, {pipeline_mode = #tpu.pipeline_mode<synchronous>, transform_indices = @transform_2, window_bounds = array<i64: 8, 8>}, {pipeline_mode = #tpu.pipeline_mode<synchronous>, transform_indices = @transform_3, window_bounds = array<i64: 8, 8>}, {transform_indices = @transform_4, window_bounds = array<i64: 2, 8, 128>}]} {
    %c0 = arith.constant 0 : index
    %c0_0 = arith.constant 0 : index
    %c0_1 = arith.constant 0 : index
    %0 = vector.load %arg2[%c0, %c0_0, %c0_1] : memref<2x8x128xf32, #tpu.memory_space<vmem>>, vector<2x8x128xf32>
    %1 = vector.shape_cast %0 : vector<2x8x128xf32> to vector<16x128xf32>
    %c0_2 = arith.constant 0 : index
    %c0_3 = arith.constant 0 : index
    %2 = vector.load %arg3[%c0_2, %c0_3] : memref<128x256xf32, #tpu.memory_space<vmem>>, vector<128x256xf32>
    %cst = arith.constant dense<0.000000e+00> : vector<16x256xf32>
    %3 = tpu.matmul %1, %2, %cst {dimension_numbers = #tpu.dot_dimension_numbers<[1], [0], [0], [1], [0, 0, 1, 1], [], []>} : vector<16x128xf32>, vector<128x256xf32>, vector<16x256xf32> -> vector<16x256xf32>
    %4 = vector.shape_cast %3 : vector<16x256xf32> to vector<2x8x256xf32>
    %c0_4 = arith.constant 0 : index
    %c0_5 = arith.constant 0 : index
    %5 = vector.load %arg4[%c0_4, %c0_5] : memref<8x8xf32, #tpu.memory_space<vmem>>, vector<8x8xf32>
    %c0_6 = arith.constant 0 : index
    %c0_7 = arith.constant 0 : index
    %6 = vector.load %arg5[%c0_6, %c0_7] : memref<8x8xf32, #tpu.memory_space<vmem>>, vector<8x8xf32>
    %7 = vector.extract_strided_slice %4 {offsets = [0, 0, 0], sizes = [1, 8, 128], strides = [1, 1, 1]} : vector<2x8x256xf32> to vector<1x8x128xf32>
    %8 = vector.shape_cast %7 : vector<1x8x128xf32> to vector<8x128xf32>
    %9 = vector.extract_strided_slice %4 {offsets = [0, 0, 128], sizes = [1, 8, 128], strides = [1, 1, 1]} : vector<2x8x256xf32> to vector<1x8x128xf32>
    %10 = vector.shape_cast %9 : vector<1x8x128xf32> to vector<8x128xf32>
    %cst_8 = arith.constant dense<0.000000e+00> : vector<8x128xf32>
    %11 = tpu.matmul %5, %8, %cst_8 {dimension_numbers = #tpu.dot_dimension_numbers<[1], [0], [0], [1], [0, 0, 1, 1], [], []>} : vector<8x8xf32>, vector<8x128xf32>, vector<8x128xf32> -> vector<8x128xf32>
    %cst_9 = arith.constant dense<0.000000e+00> : vector<8x128xf32>
    %12 = tpu.matmul %6, %10, %cst_9 {dimension_numbers = #tpu.dot_dimension_numbers<[1], [0], [0], [1], [0, 0, 1, 1], [], []>} : vector<8x8xf32>, vector<8x128xf32>, vector<8x128xf32> -> vector<8x128xf32>
    %13 = arith.subf %11, %12 : vector<8x128xf32>
    %c0_10 = arith.constant 0 : index
    %c0_11 = arith.constant 0 : index
    %c0_12 = arith.constant 0 : index
    %14 = vector.load %arg6[%c0_10, %c0_11, %c0_12] : memref<2x8x128xf32, #tpu.memory_space<vmem>>, vector<1x8x128xf32>
    %15 = vector.shape_cast %14 : vector<1x8x128xf32> to vector<8x128xf32>
    %16 = vector.shape_cast %13 : vector<8x128xf32> to vector<1x8x128xf32>
    tpu.vector_store %arg6[%c0_10, %c0_11, %c0_12], %16 {strides = array<i32>} : memref<2x8x128xf32, #tpu.memory_space<vmem>>, vector<1x8x128xf32>,
    %17 = vector.extract_strided_slice %4 {offsets = [1, 0, 0], sizes = [1, 8, 128], strides = [1, 1, 1]} : vector<2x8x256xf32> to vector<1x8x128xf32>
    %18 = vector.shape_cast %17 : vector<1x8x128xf32> to vector<8x128xf32>
    %19 = vector.extract_strided_slice %4 {offsets = [1, 0, 128], sizes = [1, 8, 128], strides = [1, 1, 1]} : vector<2x8x256xf32> to vector<1x8x128xf32>
    %20 = vector.shape_cast %19 : vector<1x8x128xf32> to vector<8x128xf32>
    %cst_13 = arith.constant dense<0.000000e+00> : vector<8x128xf32>
    %21 = tpu.matmul %5, %18, %cst_13 {dimension_numbers = #tpu.dot_dimension_numbers<[1], [0], [0], [1], [0, 0, 1, 1], [], []>} : vector<8x8xf32>, vector<8x128xf32>, vector<8x128xf32> -> vector<8x128xf32>
    %cst_14 = arith.constant dense<0.000000e+00> : vector<8x128xf32>
    %22 = tpu.matmul %6, %20, %cst_14 {dimension_numbers = #tpu.dot_dimension_numbers<[1], [0], [0], [1], [0, 0, 1, 1], [], []>} : vector<8x8xf32>, vector<8x128xf32>, vector<8x128xf32> -> vector<8x128xf32>
    %23 = arith.subf %21, %22 : vector<8x128xf32>
    %c1 = arith.constant 1 : index
    %c0_15 = arith.constant 0 : index
    %c0_16 = arith.constant 0 : index
    %24 = vector.load %arg6[%c1, %c0_15, %c0_16] : memref<2x8x128xf32, #tpu.memory_space<vmem>>, vector<1x8x128xf32>
    %25 = vector.shape_cast %24 : vector<1x8x128xf32> to vector<8x128xf32>
    %26 = vector.shape_cast %23 : vector<8x128xf32> to vector<1x8x128xf32>
    tpu.vector_store %arg6[%c1, %c0_15, %c0_16], %26 {strides = array<i32>} : memref<2x8x128xf32, #tpu.memory_space<vmem>>, vector<1x8x128xf32>,
    return
  }
  func.func @transform_0(%arg0: i32, %arg1: i32) -> (i32, i32, i32) {
    %c0_i32 = arith.constant 0 : i32
    %c0_i32_0 = arith.constant 0 : i32
    %c0_i32_1 = arith.constant 0 : i32
    return %arg0, %c0_i32, %c0_i32_0 : i32, i32, i32
  }
  func.func @transform_1(%arg0: i32, %arg1: i32) -> (i32, i32) {
    %c0_i32 = arith.constant 0 : i32
    %c0_i32_0 = arith.constant 0 : i32
    return %c0_i32, %arg1 : i32, i32
  }
  func.func @transform_2(%arg0: i32, %arg1: i32) -> (i32, i32) {
    %c0_i32 = arith.constant 0 : i32
    %c0_i32_0 = arith.constant 0 : i32
    %c0_i32_1 = arith.constant 0 : i32
    return %c0_i32, %c0_i32_0 : i32, i32
  }
  func.func @transform_3(%arg0: i32, %arg1: i32) -> (i32, i32) {
    %c0_i32 = arith.constant 0 : i32
    %c0_i32_0 = arith.constant 0 : i32
    %c0_i32_1 = arith.constant 0 : i32
    return %c0_i32, %c0_i32_0 : i32, i32
  }
  func.func @transform_4(%arg0: i32, %arg1: i32) -> (i32, i32, i32) {
    %c0_i32 = arith.constant 0 : i32
    %c0_i32_0 = arith.constant 0 : i32
    return %arg0, %c0_i32, %arg1 : i32, i32, i32
  }
}

</mosaic_0001>

<llo_original>
// kernel: tpu_custom_call.1
$region0: #{tpu_custom_call.1}
  #allocation0 [shape = 'u32[]', space=smem, size = 0x4, offset = 0x4, fixed_abs, tag = 'smem constant byte address 0x4 - core index']
  #allocation1 [shape = 'u32[72,128]{1,0:T(1,128)}', space=vmem, size = 0x9000, scoped, tag = 'internal scratch']
  %s0 = inlined_call_operand.hbm [shape: f32[2,8,128], index: 0, kind: input, shape index: {}]
  %s1 = inlined_call_operand.hbm [shape: f32[128,256], index: 1, kind: input, shape index: {}]
  %s2 = inlined_call_operand.hbm [shape: f32[8,8], index: 2, kind: input, shape index: {}]
  %s3 = inlined_call_operand.hbm [shape: f32[8,8], index: 3, kind: input, shape index: {}]
  %s4 = inlined_call_operand.hbm [shape: f32[2,8,128], index: 4, kind: output, shape index: {}]
  %s5 = sld [smem:[#allocation0]]
  $region42: #{tpu_custom_call.1} parent=0
    _
  %s7 = ssub.s32 1, %s5
  %s8 = scalar_select 0, %s7, %s5
  $region1: #{tpu_custom_call.1} parent=0
    #allocation2 [shape = 'u8[8192]{0}', space=vmem, size = 0x2000, scoped, tag = 'input window, operand 0, single buffered']
    #allocation3 [shape = 's32[1]{0}', space=sflag, size = 0x4, scoped, tag = 'scoped memory for tpu_custom_call.1']
    #allocation4 [shape = 's32[1]{0}', space=sflag, size = 0x4, scoped, tag = 'scoped memory for tpu_custom_call.1']
    #allocation5 [shape = 'u8[131072]{0}', space=vmem, size = 0x20000, scoped, tag = 'input window, operand 1, single buffered']
    #allocation6 [shape = 's32[1]{0}', space=sflag, size = 0x4, scoped, tag = 'scoped memory for tpu_custom_call.1']
    #allocation7 [shape = 'u8[4096]{0}', space=vmem, size = 0x1000, scoped, tag = 'input window, operand 2, single buffered']
    #allocation8 [shape = 'u8[4096]{0}', space=vmem, size = 0x1000, scoped, tag = 'input window, operand 3, single buffered']
    #allocation9 [shape = 's32[1]{0}', space=sflag, size = 0x4, scoped, tag = 'scoped memory for tpu_custom_call.1']
    #allocation10 [shape = 'u8[8192]{0}', space=vmem, size = 0x2000, scoped, tag = 'output window, operand 0, single buffered']
    %9 = vsyncpa [#allocation3], 0
    %10 = vsyncpa [#allocation6], 0
    %11 = vsyncpa [#allocation9], 0
    %12 = vsyncpa [#allocation4], 0
    // Predicated region
    $region2: #{tpu_custom_call.1} parent=1 // pred_check
      _
    $region3: #{tpu_custom_call.1} parent=1 // pred_check_branch
      %14 = sbr.rel (0) target = $region5
    $region4: #{tpu_custom_call.1} parent=1 // pred_region
      %16 = vsyncadd [#allocation3], 0
      %s17 = sshll.u32 %s0, 4
      %s18 = int_to_ptr.hbm [resolvable:$true] %s17
      %s19 = sshll.u32 [#allocation2], 4
      %s20 = int_to_ptr.vmem [resolvable:$true] %s19
      %25 = dma.hbm_to_vmem [thread:$0]  %s18, 256, %s20, [#allocation3], 128, 128, 8
    $region5: #{tpu_custom_call.1} parent=1 // pred_fallthru
      _
    // Predicated region
    $region6: #{tpu_custom_call.1} parent=1 // pred_check
      _
    $region7: #{tpu_custom_call.1} parent=1 // pred_check_branch
      %27 = sbr.rel (0) target = $region9
    $region8: #{tpu_custom_call.1} parent=1 // pred_region
      %29 = vsyncadd [#allocation6], 0
      %s30 = sshll.u32 %s1, 4
      %s31 = int_to_ptr.hbm [resolvable:$true] %s30
      %s32 = sshll.u32 [#allocation5], 4
      %s33 = int_to_ptr.vmem [resolvable:$true] %s32
      %38 = dma.hbm_to_vmem [thread:$0]  %s31, 4096, %s33, [#allocation6], 256, 256, 16
    $region9: #{tpu_custom_call.1} parent=1 // pred_fallthru
      _
    // Predicated region
    $region10: #{tpu_custom_call.1} parent=1 // pred_check
      _
    $region11: #{tpu_custom_call.1} parent=1 // pred_check_branch
      %40 = sbr.rel (0) target = $region13
    $region12: #{tpu_custom_call.1} parent=1 // pred_region
      %42 = vsyncadd [#allocation6], 0
      %s44 = sshll.u32 %s2, 4
      %s45 = int_to_ptr.hbm [resolvable:$true] %s44
      %s46 = sshll.u32 [#allocation7], 4
      %s47 = int_to_ptr.vmem [resolvable:$true] %s46
      %49 = dma.hbm_to_vmem [thread:$0]  %s45, 128, %s47, [#allocation6]
    $region13: #{tpu_custom_call.1} parent=1 // pred_fallthru
      _
    // Predicated region
    $region14: #{tpu_custom_call.1} parent=1 // pred_check
      _
    $region15: #{tpu_custom_call.1} parent=1 // pred_check_branch
      %51 = sbr.rel (0) target = $region17
    $region16: #{tpu_custom_call.1} parent=1 // pred_region
      %53 = vsyncadd [#allocation9], 0
      %s55 = sshll.u32 %s3, 4
      %s56 = int_to_ptr.hbm [resolvable:$true] %s55
      %s57 = sshll.u32 [#allocation8], 4
      %s58 = int_to_ptr.vmem [resolvable:$true] %s57
      %60 = dma.hbm_to_vmem [thread:$0]  %s56, 128, %s58, [#allocation9]
    $region17: #{tpu_custom_call.1} parent=1 // pred_fallthru
      _
    // Predicated region
    $region18: #{tpu_custom_call.1} parent=1 // pred_check
      _
    $region19: #{tpu_custom_call.1} parent=1 // pred_check_branch
      %62 = sbr.rel (0) target = $region21
    $region20: #{tpu_custom_call.1} parent=1 // pred_region
      %64 = dma.done [#allocation3], 256
    $region21: #{tpu_custom_call.1} parent=1 // pred_fallthru
      _
    // Predicated region
    $region22: #{tpu_custom_call.1} parent=1 // pred_check
      _
    $region23: #{tpu_custom_call.1} parent=1 // pred_check_branch
      %66 = sbr.rel (0) target = $region25
    $region24: #{tpu_custom_call.1} parent=1 // pred_region
      %68 = dma.done [#allocation6], 4096
    $region25: #{tpu_custom_call.1} parent=1 // pred_fallthru
      _
    // Predicated region
    $region26: #{tpu_custom_call.1} parent=1 // pred_check
      _
    $region27: #{tpu_custom_call.1} parent=1 // pred_check_branch
      %70 = sbr.rel (0) target = $region29
    $region28: #{tpu_custom_call.1} parent=1 // pred_region
      %72 = dma.done [#allocation6], 128
    $region29: #{tpu_custom_call.1} parent=1 // pred_fallthru
      _
    // Predicated region
    $region30: #{tpu_custom_call.1} parent=1 // pred_check
      _
    $region31: #{tpu_custom_call.1} parent=1 // pred_check_branch
      %74 = sbr.rel (0) target = $region33
    $region32: #{tpu_custom_call.1} parent=1 // pred_region
      %76 = dma.done [#allocation9], 128
    $region33: #{tpu_custom_call.1} parent=1 // pred_fallthru
      _
    %v77 = vld [vmem:[#allocation2] sm:$0xff]
    %v78 = vld [vmem:[#allocation2 + $0x8] sm:$0xff]
    %v79 = vld [vmem:[#allocation5] sm:$0xff]
    %v80 = vld [vmem:[#allocation5 + $0x8] sm:$0xff]
    %v81 = vld [vmem:[#allocation5 + $0x10] sm:$0xff]
    %v82 = vld [vmem:[#allocation5 + $0x18] sm:$0xff]
    %v83 = vld [vmem:[#allocation5 + $0x20] sm:$0xff]
    %v84 = vld [vmem:[#allocation5 + $0x28] sm:$0xff]
    %v85 = vld [vmem:[#allocation5 + $0x30] sm:$0xff]
    %v86 = vld [vmem:[#allocation5 + $0x38] sm:$0xff]
    %v87 = vld [vmem:[#allocation5 + $0x40] sm:$0xff]
    %v88 = vld [vmem:[#allocation5 + $0x48] sm:$0xff]
    %v89 = vld [vmem:[#allocation5 + $0x50] sm:$0xff]
    %v90 = vld [vmem:[#allocation5 + $0x58] sm:$0xff]
    %v91 = vld [vmem:[#allocation5 + $0x60] sm:$0xff]
    %v92 = vld [vmem:[#allocation5 + $0x68] sm:$0xff]
    %v93 = vld [vmem:[#allocation5 + $0x70] sm:$0xff]
    %v94 = vld [vmem:[#allocation5 + $0x78] sm:$0xff]
    %v95 = vld [vmem:[#allocation5 + $0x80] sm:$0xff]
    %v96 = vld [vmem:[#allocation5 + $0x88] sm:$0xff]
    %v97 = vld [vmem:[#allocation5 + $0x90] sm:$0xff]
    %v98 = vld [vmem:[#allocation5 + $0x98] sm:$0xff]
    %v99 = vld [vmem:[#allocation5 + $0xa0] sm:$0xff]
    %v100 = vld [vmem:[#allocation5 + $0xa8] sm:$0xff]
    %v101 = vld [vmem:[#allocation5 + $0xb0] sm:$0xff]
    %v102 = vld [vmem:[#allocation5 + $0xb8] sm:$0xff]
    %v103 = vld [vmem:[#allocation5 + $0xc0] sm:$0xff]
    %v104 = vld [vmem:[#allocation5 + $0xc8] sm:$0xff]
    %v105 = vld [vmem:[#allocation5 + $0xd0] sm:$0xff]
    %v106 = vld [vmem:[#allocation5 + $0xd8] sm:$0xff]
    %v107 = vld [vmem:[#allocation5 + $0xe0] sm:$0xff]
    %v108 = vld [vmem:[#allocation5 + $0xe8] sm:$0xff]
    %v109 = vld [vmem:[#allocation5 + $0xf0] sm:$0xff]
    %v110 = vld [vmem:[#allocation5 + $0xf8] sm:$0xff]
    %111 = vmatpush.msra.mxu0 %v109
    %112 = vmatpush.msra.mxu0 %v107
    %113 = vmatpush.msra.mxu0 %v105
    %114 = vmatpush.msra.mxu0 %v103
    %115 = vmatpush.msra.mxu0 %v101
    %116 = vmatpush.msra.mxu0 %v99
    %117 = vmatpush.msra.mxu0 %v97
    %118 = vmatpush.msra.mxu0 %v95
    %119 = vmatpush.msra.mxu0 %v93
    %120 = vmatpush.msra.mxu0 %v91
    %121 = vmatpush.msra.mxu0 %v89
    %122 = vmatpush.msra.mxu0 %v87
    %123 = vmatpush.msra.mxu0 %v85
    %124 = vmatpush.msra.mxu0 %v83
    %125 = vmatpush.msra.mxu0 %v81
    %126 = vmatpush.msra.mxu0 %v79
    %127 = vmatmul.f32.gmra.mxu0 %v77
    %v128 = vpop.f32.mrf.mxu0
    %v129 = vadd.f32 0.0, %v128
    %130 = vmatmul.f32.gmra.mxu0 %v78
    %v131 = vpop.f32.mrf.mxu0
    %v132 = vadd.f32 0.0, %v131
    %133 = vdwg.mxu0
    %134 = vmatpush.msra.mxu0 %v110
    %135 = vmatpush.msra.mxu0 %v108
    %136 = vmatpush.msra.mxu0 %v106
    %137 = vmatpush.msra.mxu0 %v104
    %138 = vmatpush.msra.mxu0 %v102
    %139 = vmatpush.msra.mxu0 %v100
    %140 = vmatpush.msra.mxu0 %v98
    %141 = vmatpush.msra.mxu0 %v96
    %142 = vmatpush.msra.mxu0 %v94
    %143 = vmatpush.msra.mxu0 %v92
    %144 = vmatpush.msra.mxu0 %v90
    %145 = vmatpush.msra.mxu0 %v88
    %146 = vmatpush.msra.mxu0 %v86
    %147 = vmatpush.msra.mxu0 %v84
    %148 = vmatpush.msra.mxu0 %v82
    %149 = vmatpush.msra.mxu0 %v80
    %150 = vmatmul.f32.gmra.mxu0 %v77
    %v151 = vpop.f32.mrf.mxu0
    %v152 = vadd.f32 0.0, %v151
    %153 = vmatmul.f32.gmra.mxu0 %v78
    %v154 = vpop.f32.mrf.mxu0
    %v155 = vadd.f32 0.0, %v154
    %156 = vdwg.mxu0
    %v157 = vld [vmem:[#allocation7] sm:$0xff]
    %v158 = vld [vmem:[#allocation8] sm:$0xff]
    %vm159 = vcmask 64512
    %v161 = vsel %vm159, %v157, 0
    %163 = vmatpush.msra.mxu0 0.0
    %164 = vmatpush.msra.mxu0 0.0
    %165 = vmatpush.msra.mxu0 0.0
    %166 = vmatpush.msra.mxu0 0.0
    %167 = vmatpush.msra.mxu0 0.0
    %168 = vmatpush.msra.mxu0 0.0
    %169 = vmatpush.msra.mxu0 0.0
    %170 = vmatpush.msra.mxu0 0.0
    %171 = vmatpush.msra.mxu0 0.0
    %172 = vmatpush.msra.mxu0 0.0
    %173 = vmatpush.msra.mxu0 0.0
    %174 = vmatpush.msra.mxu0 0.0
    %175 = vmatpush.msra.mxu0 0.0
    %176 = vmatpush.msra.mxu0 0.0
    %177 = vmatpush.msra.mxu0 0.0
    %178 = vmatpush.msra.mxu0 %v129
    %179 = vmatmul.f32.gmra.mxu0 %v161
    %v180 = vpop.f32.mrf.mxu0
    %v181 = vadd.f32 0.0, %v180
    %182 = vdwg.mxu0
    %v184 = vsel %vm159, %v158, 0
    %186 = vmatpush.msra.mxu0 0.0
    %187 = vmatpush.msra.mxu0 0.0
    %188 = vmatpush.msra.mxu0 0.0
    %189 = vmatpush.msra.mxu0 0.0
    %190 = vmatpush.msra.mxu0 0.0
    %191 = vmatpush.msra.mxu0 0.0
    %192 = vmatpush.msra.mxu0 0.0
    %193 = vmatpush.msra.mxu0 0.0
    %194 = vmatpush.msra.mxu0 0.0
    %195 = vmatpush.msra.mxu0 0.0
    %196 = vmatpush.msra.mxu0 0.0
    %197 = vmatpush.msra.mxu0 0.0
    %198 = vmatpush.msra.mxu0 0.0
    %199 = vmatpush.msra.mxu0 0.0
    %200 = vmatpush.msra.mxu0 0.0
    %201 = vmatpush.msra.mxu0 %v152
    %202 = vmatmul.f32.gmra.mxu0 %v184
    %v203 = vpop.f32.mrf.mxu0
    %v204 = vadd.f32 0.0, %v203
    %205 = vdwg.mxu0
    %v206 = vsub.f32 %v181, %v204
    %207 = vst [vmem:[#allocation10] sm:$0xff] %v206
    %208 = vmatpush.msra.mxu0 0.0
    %209 = vmatpush.msra.mxu0 0.0
    %210 = vmatpush.msra.mxu0 0.0
    %211 = vmatpush.msra.mxu0 0.0
    %212 = vmatpush.msra.mxu0 0.0
    %213 = vmatpush.msra.mxu0 0.0
    %214 = vmatpush.msra.mxu0 0.0
    %215 = vmatpush.msra.mxu0 0.0
    %216 = vmatpush.msra.mxu0 0.0
    %217 = vmatpush.msra.mxu0 0.0
    %218 = vmatpush.msra.mxu0 0.0
    %219 = vmatpush.msra.mxu0 0.0
    %220 = vmatpush.msra.mxu0 0.0
    %221 = vmatpush.msra.mxu0 0.0
    %222 = vmatpush.msra.mxu0 0.0
    %223 = vmatpush.msra.mxu0 %v132
    %224 = vmatmul.f32.gmra.mxu0 %v161
    %v225 = vpop.f32.mrf.mxu0
    %v226 = vadd.f32 0.0, %v225
    %227 = vdwg.mxu0
    %228 = vmatpush.msra.mxu0 0.0
    %229 = vmatpush.msra.mxu0 0.0
    %230 = vmatpush.msra.mxu0 0.0
    %231 = vmatpush.msra.mxu0 0.0
    %232 = vmatpush.msra.mxu0 0.0
    %233 = vmatpush.msra.mxu0 0.0
    %234 = vmatpush.msra.mxu0 0.0
    %235 = vmatpush.msra.mxu0 0.0
    %236 = vmatpush.msra.mxu0 0.0
    %237 = vmatpush.msra.mxu0 0.0
    %238 = vmatpush.msra.mxu0 0.0
    %239 = vmatpush.msra.mxu0 0.0
    %240 = vmatpush.msra.mxu0 0.0
    %241 = vmatpush.msra.mxu0 0.0
    %242 = vmatpush.msra.mxu0 0.0
    %243 = vmatpush.msra.mxu0 %v155
    %244 = vmatmul.f32.gmra.mxu0 %v184
    %v245 = vpop.f32.mrf.mxu0
    %v246 = vadd.f32 0.0, %v245
    %247 = vdwg.mxu0
    %v248 = vsub.f32 %v226, %v246
    %s249 = scalar_lea.vmem [#allocation10], 8
    %250 = vst [vmem:[%s249] sm:$0xff] %v248
    // Predicated region
    $region34: #{tpu_custom_call.1} parent=1 // pred_check
      _
    $region35: #{tpu_custom_call.1} parent=1 // pred_check_branch
      %252 = sbr.rel (0) target = $region37
    $region36: #{tpu_custom_call.1} parent=1 // pred_region
      %254 = vsyncadd [#allocation4], 0
      %s255 = sshll.u32 [#allocation10], 4
      %s256 = int_to_ptr.vmem [resolvable:$true] %s255
      %s257 = sshll.u32 %s4, 4
      %s258 = int_to_ptr.hbm [resolvable:$true] %s257
      %263 = dma.vmem_to_hbm [thread:$0]  %s256, 256, %s258, [#allocation4], 128, 128, 8
    $region37: #{tpu_custom_call.1} parent=1 // pred_fallthru
      _
    // Predicated region
    $region38: #{tpu_custom_call.1} parent=1 // pred_check
      _
    $region39: #{tpu_custom_call.1} parent=1 // pred_check_branch
      %265 = sbr.rel (0) target = $region41
    $region40: #{tpu_custom_call.1} parent=1 // pred_region
      %267 = dma.done [#allocation4], 256
    $region41: #{tpu_custom_call.1} parent=1 // pred_fallthru
      _
    %268 = vsyncpa [#allocation3], 1
    %269 = vsyncpa [#allocation6], 1
    %270 = vsyncpa [#allocation9], 1
    %271 = vsyncpa [#allocation4], 1

</llo_original>
